<compile_context>
chip_gen: v7x
topology: tpu7x:2x2x1
jax: 0.10.0
libtpu: 0.0.40
codegen_flags: <defaults>
</compile_context>

<pallas_src>
import functools

import jax
import jax.numpy as jnp
from jax.experimental import pallas as pl
from jax.experimental.pallas import tpu as pltpu


def _crp_kernel(x_ref, w_ref, row_ref, col_ref, o_ref, *, W, n_stages,
                use_mxu, mxu_dtype):
    """Whole CRP chain for one batch element.

    x_ref  : (1, C, HWp) input block
    w_ref  : (S, C, C)   all stage 1x1-conv weights, PyTorch (Cout, Cin) layout
    row_ref: (1, HWp)    int32 row index of each flat position (sentinel if pad)
    col_ref: (1, HWp)    int32 col index of each flat position (sentinel if pad)
    o_ref  : (1, C, HWp) output block (written once, at the end)
    """
    C = x_ref.shape[1]
    HWp = x_ref.shape[2]
    neg = jnp.float32(-jnp.inf)

    row = row_ref[...]                       # (1, HWp)
    col = col_ref[...]                       # (1, HWp)

    def neighbour_masks(shifts, same_axis, adj_axis):
        # Valid iff the rolled element came from the true grid neighbour:
        # same index on `same_axis`, |difference| == 1 on `adj_axis`.
        # Rolling the index vectors with the same pltpu.roll as the data makes
        # this independent of the rotate-direction convention and robust to
        # lane padding (sentinel indices never satisfy the conditions).
        masks = []
        for k in shifts:
            r_row = pltpu.roll(row, k, 1)
            r_col = pltpu.roll(col, k, 1)
            same_ok = (r_row == row) if same_axis == "row" else (r_col == col)
            d = (r_col - col) if adj_axis == "col" else (r_row - row)
            masks.append((k, same_ok & ((d == 1) | (d == -1))))
        return masks

    h_shifts = sorted({1 % HWp, (HWp - 1) % HWp} - {0})
    v_shifts = sorted({W % HWp, (HWp - W) % HWp} - {0})
    # Hoisted: computed once per grid step, reused by every stage.
    h_masks = neighbour_masks(h_shifts, same_axis="row", adj_axis="col")
    v_masks = neighbour_masks(v_shifts, same_axis="col", adj_axis="row")

    x = x_ref[0].astype(jnp.float32)         # (C, HWp)
    top = x
    acc = x                                  # residual accumulator (f32)

    for s in range(n_stages):
        # ---- 3x3 / stride 1 / pad 1 max pool (separable, -inf padding) ----
        mw = top
        for k, m in h_masks:                 # w-1 / w+1 neighbours
            v = pltpu.roll(top, k, 1)
            mw = jnp.maximum(mw, jnp.where(m, v, neg))
        pooled = mw
        for k, m in v_masks:                 # h-1 / h+1 neighbours
            v = pltpu.roll(mw, k, 1)
            pooled = jnp.maximum(pooled, jnp.where(m, v, neg))

        # ---- 1x1 conv: (Cout, Cin) @ (Cin, HWp) ----------------------------
        wmat = w_ref[s]                      # (C, C), static stage index
        if use_mxu:
            if mxu_dtype is not None:
                a = wmat.astype(mxu_dtype)
                b = pooled.astype(mxu_dtype)
            else:
                a = wmat.astype(jnp.float32)
                b = pooled
            top = jnp.dot(a, b, preferred_element_type=jnp.float32)
        else:
            # Small C: unrolled VPU broadcast-FMAs; the MXU stays free.
            w_f32 = wmat.astype(jnp.float32)
            top = w_f32[:, 0:1] * pooled[0:1, :]
            for i in range(1, C):
                top = top + w_f32[:, i:i + 1] * pooled[i:i + 1, :]

        acc = acc + top                      # x = top + x (f32 accumulation)

    o_ref[0] = acc.astype(o_ref.dtype)       # single lane-dense store


def crp_block_pallas(x_nchw, weights, *, mxu_dtype=None, mxu_min_channels=32):
    """CRPBlock forward.  x_nchw: (N, C, H, W); weights: list of (Cout, Cin)
    1x1-conv weights (PyTorch layout, no bias).  Requires Cout == Cin."""
    N, C, H, W = x_nchw.shape
    n_stages = len(weights)
    assert n_stages >= 1
    for w in weights:
        assert w.shape == (C, C), "CRPBlock residual add requires in_planes == out_planes"
    HW = H * W
    HWp = ((HW + 127) // 128) * 128          # lane-dense spatial axis

    x_flat = x_nchw.reshape(N, C, HW)        # contiguous: free reshape
    if HWp != HW:
        x_flat = jnp.pad(x_flat, ((0, 0), (0, 0), (0, HWp - HW)))
    w_stack = jnp.stack(weights, axis=0)     # (S, C, C), resident for all stages

    # Row/col index of every flattened spatial position; padded lanes get a
    # sentinel so they can never satisfy the neighbour masks.
    idx = jnp.arange(HWp, dtype=jnp.int32)
    valid = idx < HW
    sentinel = jnp.int32(-(2 ** 20))
    row_ids = jnp.where(valid, idx // W, sentinel).reshape(1, HWp)
    col_ids = jnp.where(valid, idx % W, sentinel).reshape(1, HWp)

    use_mxu = C >= mxu_min_channels

    # Explicit VMEM budget: x/out blocks (double-buffered) + weights + index
    # rows + a few f32 temporaries (top/acc/pooled/rolls), clamped to bounds
    # that are safe on every chip generation.
    itemsize = jnp.dtype(x_nchw.dtype).itemsize
    est = 2 * 2 * C * HWp * itemsize              # x, out (double-buffered)
    est += n_stages * C * C * 4 + 8 * HWp * 4     # weight stack + index rows
    est += 6 * C * HWp * 4                        # f32 temporaries
    vmem_limit = int(max(32 << 20, min(2 * est, 64 << 20)))

    kernel = functools.partial(_crp_kernel, W=W, n_stages=n_stages,
                               use_mxu=use_mxu, mxu_dtype=mxu_dtype)

    out_flat = pl.pallas_call(
        kernel,
        out_shape=jax.ShapeDtypeStruct((N, C, HWp), x_nchw.dtype),
        grid=(N,),
        in_specs=[
            pl.BlockSpec((1, C, HWp), lambda n: (n, 0, 0)),        # x
            pl.BlockSpec((n_stages, C, C), lambda n: (0, 0, 0)),   # all weights
            pl.BlockSpec((1, HWp), lambda n: (0, 0)),              # row ids
            pl.BlockSpec((1, HWp), lambda n: (0, 0)),              # col ids
        ],
        out_specs=pl.BlockSpec((1, C, HWp), lambda n: (n, 0, 0)),
        compiler_params=pltpu.CompilerParams(
            dimension_semantics=("parallel",),
            vmem_limit_bytes=vmem_limit),
    )(x_flat, w_stack, row_ids, col_ids)

    return out_flat[:, :, :HW].reshape(N, C, H, W)


def crp_block_ref(x_nchw, weights):
    """Pure-JAX reference mirroring the PyTorch forward (NCHW)."""
    x = x_nchw
    top = x
    for w in weights:
        top = jax.lax.reduce_window(
            top, -jnp.inf, jax.lax.max,
            window_dimensions=(1, 1, 3, 3),
            window_strides=(1, 1, 1, 1),
            padding=[(0, 0), (0, 0), (1, 1), (1, 1)])
        top = jnp.einsum('oc,nchw->nohw', w, top)     # 1x1 conv, no bias
        x = top + x
    return x


if __name__ == "__main__":
    N, C, H, W = 2, 4, 16, 16
    n_stages = 4

    key = jax.random.PRNGKey(0)
    kx, *kws = jax.random.split(key, 1 + n_stages)
    x = jax.random.normal(kx, (N, C, H, W), dtype=jnp.float32)
    # Conv1x1 weights: PyTorch shape (Cout, Cin, 1, 1) -> kept as (Cout, Cin).
    weights = [0.1 * jax.random.normal(k, (C, C), dtype=jnp.float32) for k in kws]

    out = jax.block_until_ready(crp_block_pallas(x, weights))
    ref = crp_block_ref(x, weights)

    assert out.shape == (N, C, H, W)
    assert jnp.allclose(out, ref, atol=1e-4, rtol=1e-4), float(jnp.max(jnp.abs(out - ref)))

    print("KERNEL_OK")
</pallas_src>

<mosaic_0001>
module attributes {stable_mosaic.version = 11 : i64} {
  func.func @_crp_kernel(%arg0: i32, %arg1: memref<1x4x256xf32, #tpu.memory_space<vmem>>, %arg2: memref<4x4x4xf32, #tpu.memory_space<vmem>>, %arg3: memref<1x256xi32, #tpu.memory_space<vmem>>, %arg4: memref<1x256xi32, #tpu.memory_space<vmem>>, %arg5: memref<1x4x256xf32, #tpu.memory_space<vmem>>) attributes {dimension_semantics = [#tpu.dimension_semantics<parallel>], iteration_bounds = array<i64: 2>, scalar_prefetch = 0 : i64, scratch_operands = 0 : i64, tpu.core_type = #tpu.core_type<tc>, window_params = [{transform_indices = @transform_0, window_bounds = array<i64: 1, 4, 256>}, {pipeline_mode = #tpu.pipeline_mode<synchronous>, transform_indices = @transform_1, window_bounds = array<i64: 4, 4, 4>}, {pipeline_mode = #tpu.pipeline_mode<synchronous>, transform_indices = @transform_2, window_bounds = array<i64: 1, 256>}, {pipeline_mode = #tpu.pipeline_mode<synchronous>, transform_indices = @transform_3, window_bounds = array<i64: 1, 256>}, {transform_indices = @transform_4, window_bounds = array<i64: 1, 4, 256>}]} {
    %c0 = arith.constant 0 : index
    %c0_0 = arith.constant 0 : index
    %0 = vector.load %arg3[%c0, %c0_0] : memref<1x256xi32, #tpu.memory_space<vmem>>, vector<1x256xi32>
    %c0_1 = arith.constant 0 : index
    %c0_2 = arith.constant 0 : index
    %1 = vector.load %arg4[%c0_1, %c0_2] : memref<1x256xi32, #tpu.memory_space<vmem>>, vector<1x256xi32>
    %c1_i32 = arith.constant 1 : i32
    %2 = tpu.dynamic_rotate %0 by %c1_i32 dim 1 : vector<1x256xi32>, i32 -> vector<1x256xi32>
    %c1_i32_3 = arith.constant 1 : i32
    %3 = tpu.dynamic_rotate %1 by %c1_i32_3 dim 1 : vector<1x256xi32>, i32 -> vector<1x256xi32>
    %4 = arith.cmpi eq, %2, %0 : vector<1x256xi32>
    %5 = arith.subi %3, %1 : vector<1x256xi32>
    %c1_i32_4 = arith.constant 1 : i32
    %6 = vector.broadcast %c1_i32_4 : i32 to vector<1x256xi32>
    %7 = arith.cmpi eq, %5, %6 : vector<1x256xi32>
    %c-1_i32 = arith.constant -1 : i32
    %8 = vector.broadcast %c-1_i32 : i32 to vector<1x256xi32>
    %9 = arith.cmpi eq, %5, %8 : vector<1x256xi32>
    %10 = arith.ori %7, %9 : vector<1x256xi1>
    %11 = arith.andi %4, %10 : vector<1x256xi1>
    %c255_i32 = arith.constant 255 : i32
    %12 = tpu.dynamic_rotate %0 by %c255_i32 dim 1 : vector<1x256xi32>, i32 -> vector<1x256xi32>
    %c255_i32_5 = arith.constant 255 : i32
    %13 = tpu.dynamic_rotate %1 by %c255_i32_5 dim 1 : vector<1x256xi32>, i32 -> vector<1x256xi32>
    %14 = arith.cmpi eq, %12, %0 : vector<1x256xi32>
    %15 = arith.subi %13, %1 : vector<1x256xi32>
    %c1_i32_6 = arith.constant 1 : i32
    %16 = vector.broadcast %c1_i32_6 : i32 to vector<1x256xi32>
    %17 = arith.cmpi eq, %15, %16 : vector<1x256xi32>
    %c-1_i32_7 = arith.constant -1 : i32
    %18 = vector.broadcast %c-1_i32_7 : i32 to vector<1x256xi32>
    %19 = arith.cmpi eq, %15, %18 : vector<1x256xi32>
    %20 = arith.ori %17, %19 : vector<1x256xi1>
    %21 = arith.andi %14, %20 : vector<1x256xi1>
    %c16_i32 = arith.constant 16 : i32
    %22 = tpu.dynamic_rotate %0 by %c16_i32 dim 1 : vector<1x256xi32>, i32 -> vector<1x256xi32>
    %c16_i32_8 = arith.constant 16 : i32
    %23 = tpu.dynamic_rotate %1 by %c16_i32_8 dim 1 : vector<1x256xi32>, i32 -> vector<1x256xi32>
    %24 = arith.cmpi eq, %23, %1 : vector<1x256xi32>
    %25 = arith.subi %22, %0 : vector<1x256xi32>
    %c1_i32_9 = arith.constant 1 : i32
    %26 = vector.broadcast %c1_i32_9 : i32 to vector<1x256xi32>
    %27 = arith.cmpi eq, %25, %26 : vector<1x256xi32>
    %c-1_i32_10 = arith.constant -1 : i32
    %28 = vector.broadcast %c-1_i32_10 : i32 to vector<1x256xi32>
    %29 = arith.cmpi eq, %25, %28 : vector<1x256xi32>
    %30 = arith.ori %27, %29 : vector<1x256xi1>
    %31 = arith.andi %24, %30 : vector<1x256xi1>
    %c240_i32 = arith.constant 240 : i32
    %32 = tpu.dynamic_rotate %0 by %c240_i32 dim 1 : vector<1x256xi32>, i32 -> vector<1x256xi32>
    %c240_i32_11 = arith.constant 240 : i32
    %33 = tpu.dynamic_rotate %1 by %c240_i32_11 dim 1 : vector<1x256xi32>, i32 -> vector<1x256xi32>
    %34 = arith.cmpi eq, %33, %1 : vector<1x256xi32>
    %35 = arith.subi %32, %0 : vector<1x256xi32>
    %c1_i32_12 = arith.constant 1 : i32
    %36 = vector.broadcast %c1_i32_12 : i32 to vector<1x256xi32>
    %37 = arith.cmpi eq, %35, %36 : vector<1x256xi32>
    %c-1_i32_13 = arith.constant -1 : i32
    %38 = vector.broadcast %c-1_i32_13 : i32 to vector<1x256xi32>
    %39 = arith.cmpi eq, %35, %38 : vector<1x256xi32>
    %40 = arith.ori %37, %39 : vector<1x256xi1>
    %41 = arith.andi %34, %40 : vector<1x256xi1>
    %c0_14 = arith.constant 0 : index
    %c0_15 = arith.constant 0 : index
    %c0_16 = arith.constant 0 : index
    %42 = vector.load %arg1[%c0_14, %c0_15, %c0_16] : memref<1x4x256xf32, #tpu.memory_space<vmem>>, vector<1x4x256xf32>
    %43 = vector.shape_cast %42 : vector<1x4x256xf32> to vector<4x256xf32>
    %c1_i32_17 = arith.constant 1 : i32
    %44 = tpu.dynamic_rotate %43 by %c1_i32_17 dim 1 : vector<4x256xf32>, i32 -> vector<4x256xf32>
    %cst = arith.constant 0xFF800000 : f32
    %45 = vector.shape_cast %11 : vector<1x256xi1> to vector<1x256xi1>
    %46 = vector.broadcast %45 : vector<1x256xi1> to vector<4x256xi1>
    %47 = vector.broadcast %cst : f32 to vector<4x256xf32>
    %48 = arith.select %46, %44, %47 : vector<4x256xi1>, vector<4x256xf32>
    %49 = arith.maximumf %43, %48 : vector<4x256xf32>
    %c255_i32_18 = arith.constant 255 : i32
    %50 = tpu.dynamic_rotate %43 by %c255_i32_18 dim 1 : vector<4x256xf32>, i32 -> vector<4x256xf32>
    %cst_19 = arith.constant 0xFF800000 : f32
    %51 = vector.shape_cast %21 : vector<1x256xi1> to vector<1x256xi1>
    %52 = vector.broadcast %51 : vector<1x256xi1> to vector<4x256xi1>
    %53 = vector.broadcast %cst_19 : f32 to vector<4x256xf32>
    %54 = arith.select %52, %50, %53 : vector<4x256xi1>, vector<4x256xf32>
    %55 = arith.maximumf %49, %54 : vector<4x256xf32>
    %c16_i32_20 = arith.constant 16 : i32
    %56 = tpu.dynamic_rotate %55 by %c16_i32_20 dim 1 : vector<4x256xf32>, i32 -> vector<4x256xf32>
    %cst_21 = arith.constant 0xFF800000 : f32
    %57 = vector.shape_cast %31 : vector<1x256xi1> to vector<1x256xi1>
    %58 = vector.broadcast %57 : vector<1x256xi1> to vector<4x256xi1>
    %59 = vector.broadcast %cst_21 : f32 to vector<4x256xf32>
    %60 = arith.select %58, %56, %59 : vector<4x256xi1>, vector<4x256xf32>
    %61 = arith.maximumf %55, %60 : vector<4x256xf32>
    %c240_i32_22 = arith.constant 240 : i32
    %62 = tpu.dynamic_rotate %55 by %c240_i32_22 dim 1 : vector<4x256xf32>, i32 -> vector<4x256xf32>
    %cst_23 = arith.constant 0xFF800000 : f32
    %63 = vector.shape_cast %41 : vector<1x256xi1> to vector<1x256xi1>
    %64 = vector.broadcast %63 : vector<1x256xi1> to vector<4x256xi1>
    %65 = vector.broadcast %cst_23 : f32 to vector<4x256xf32>
    %66 = arith.select %64, %62, %65 : vector<4x256xi1>, vector<4x256xf32>
    %67 = arith.maximumf %61, %66 : vector<4x256xf32>
    %c0_24 = arith.constant 0 : index
    %c0_25 = arith.constant 0 : index
    %c0_26 = arith.constant 0 : index
    %68 = vector.load %arg2[%c0_24, %c0_25, %c0_26] : memref<4x4x4xf32, #tpu.memory_space<vmem>>, vector<1x4x4xf32>
    %69 = vector.shape_cast %68 : vector<1x4x4xf32> to vector<4x4xf32>
    %70 = vector.extract_strided_slice %69 {offsets = [0, 0], sizes = [4, 1], strides = [1, 1]} : vector<4x4xf32> to vector<4x1xf32>
    %71 = vector.extract_strided_slice %67 {offsets = [0, 0], sizes = [1, 256], strides = [1, 1]} : vector<4x256xf32> to vector<1x256xf32>
    %72 = vector.broadcast %70 : vector<4x1xf32> to vector<4x256xf32>
    %73 = vector.broadcast %71 : vector<1x256xf32> to vector<4x256xf32>
    %74 = arith.mulf %72, %73 : vector<4x256xf32>
    %75 = vector.extract_strided_slice %69 {offsets = [0, 1], sizes = [4, 1], strides = [1, 1]} : vector<4x4xf32> to vector<4x1xf32>
    %76 = vector.extract_strided_slice %67 {offsets = [1, 0], sizes = [1, 256], strides = [1, 1]} : vector<4x256xf32> to vector<1x256xf32>
    %77 = vector.broadcast %75 : vector<4x1xf32> to vector<4x256xf32>
    %78 = vector.broadcast %76 : vector<1x256xf32> to vector<4x256xf32>
    %79 = arith.mulf %77, %78 : vector<4x256xf32>
    %80 = arith.addf %74, %79 : vector<4x256xf32>
    %81 = vector.extract_strided_slice %69 {offsets = [0, 2], sizes = [4, 1], strides = [1, 1]} : vector<4x4xf32> to vector<4x1xf32>
    %82 = vector.extract_strided_slice %67 {offsets = [2, 0], sizes = [1, 256], strides = [1, 1]} : vector<4x256xf32> to vector<1x256xf32>
    %83 = vector.broadcast %81 : vector<4x1xf32> to vector<4x256xf32>
    %84 = vector.broadcast %82 : vector<1x256xf32> to vector<4x256xf32>
    %85 = arith.mulf %83, %84 : vector<4x256xf32>
    %86 = arith.addf %80, %85 : vector<4x256xf32>
    %87 = vector.extract_strided_slice %69 {offsets = [0, 3], sizes = [4, 1], strides = [1, 1]} : vector<4x4xf32> to vector<4x1xf32>
    %88 = vector.extract_strided_slice %67 {offsets = [3, 0], sizes = [1, 256], strides = [1, 1]} : vector<4x256xf32> to vector<1x256xf32>
    %89 = vector.broadcast %87 : vector<4x1xf32> to vector<4x256xf32>
    %90 = vector.broadcast %88 : vector<1x256xf32> to vector<4x256xf32>
    %91 = arith.mulf %89, %90 : vector<4x256xf32>
    %92 = arith.addf %86, %91 : vector<4x256xf32>
    %93 = arith.addf %43, %92 : vector<4x256xf32>
    %c1_i32_27 = arith.constant 1 : i32
    %94 = tpu.dynamic_rotate %92 by %c1_i32_27 dim 1 : vector<4x256xf32>, i32 -> vector<4x256xf32>
    %cst_28 = arith.constant 0xFF800000 : f32
    %95 = vector.shape_cast %11 : vector<1x256xi1> to vector<1x256xi1>
    %96 = vector.broadcast %95 : vector<1x256xi1> to vector<4x256xi1>
    %97 = vector.broadcast %cst_28 : f32 to vector<4x256xf32>
    %98 = arith.select %96, %94, %97 : vector<4x256xi1>, vector<4x256xf32>
    %99 = arith.maximumf %92, %98 : vector<4x256xf32>
    %c255_i32_29 = arith.constant 255 : i32
    %100 = tpu.dynamic_rotate %92 by %c255_i32_29 dim 1 : vector<4x256xf32>, i32 -> vector<4x256xf32>
    %cst_30 = arith.constant 0xFF800000 : f32
    %101 = vector.shape_cast %21 : vector<1x256xi1> to vector<1x256xi1>
    %102 = vector.broadcast %101 : vector<1x256xi1> to vector<4x256xi1>
    %103 = vector.broadcast %cst_30 : f32 to vector<4x256xf32>
    %104 = arith.select %102, %100, %103 : vector<4x256xi1>, vector<4x256xf32>
    %105 = arith.maximumf %99, %104 : vector<4x256xf32>
    %c16_i32_31 = arith.constant 16 : i32
    %106 = tpu.dynamic_rotate %105 by %c16_i32_31 dim 1 : vector<4x256xf32>, i32 -> vector<4x256xf32>
    %cst_32 = arith.constant 0xFF800000 : f32
    %107 = vector.shape_cast %31 : vector<1x256xi1> to vector<1x256xi1>
    %108 = vector.broadcast %107 : vector<1x256xi1> to vector<4x256xi1>
    %109 = vector.broadcast %cst_32 : f32 to vector<4x256xf32>
    %110 = arith.select %108, %106, %109 : vector<4x256xi1>, vector<4x256xf32>
    %111 = arith.maximumf %105, %110 : vector<4x256xf32>
    %c240_i32_33 = arith.constant 240 : i32
    %112 = tpu.dynamic_rotate %105 by %c240_i32_33 dim 1 : vector<4x256xf32>, i32 -> vector<4x256xf32>
    %cst_34 = arith.constant 0xFF800000 : f32
    %113 = vector.shape_cast %41 : vector<1x256xi1> to vector<1x256xi1>
    %114 = vector.broadcast %113 : vector<1x256xi1> to vector<4x256xi1>
    %115 = vector.broadcast %cst_34 : f32 to vector<4x256xf32>
    %116 = arith.select %114, %112, %115 : vector<4x256xi1>, vector<4x256xf32>
    %117 = arith.maximumf %111, %116 : vector<4x256xf32>
    %c1 = arith.constant 1 : index
    %c0_35 = arith.constant 0 : index
    %c0_36 = arith.constant 0 : index
    %118 = vector.load %arg2[%c1, %c0_35, %c0_36] : memref<4x4x4xf32, #tpu.memory_space<vmem>>, vector<1x4x4xf32>
    %119 = vector.shape_cast %118 : vector<1x4x4xf32> to vector<4x4xf32>
    %120 = vector.extract_strided_slice %119 {offsets = [0, 0], sizes = [4, 1], strides = [1, 1]} : vector<4x4xf32> to vector<4x1xf32>
    %121 = vector.extract_strided_slice %117 {offsets = [0, 0], sizes = [1, 256], strides = [1, 1]} : vector<4x256xf32> to vector<1x256xf32>
    %122 = vector.broadcast %120 : vector<4x1xf32> to vector<4x256xf32>
    %123 = vector.broadcast %121 : vector<1x256xf32> to vector<4x256xf32>
    %124 = arith.mulf %122, %123 : vector<4x256xf32>
    %125 = vector.extract_strided_slice %119 {offsets = [0, 1], sizes = [4, 1], strides = [1, 1]} : vector<4x4xf32> to vector<4x1xf32>
    %126 = vector.extract_strided_slice %117 {offsets = [1, 0], sizes = [1, 256], strides = [1, 1]} : vector<4x256xf32> to vector<1x256xf32>
    %127 = vector.broadcast %125 : vector<4x1xf32> to vector<4x256xf32>
    %128 = vector.broadcast %126 : vector<1x256xf32> to vector<4x256xf32>
    %129 = arith.mulf %127, %128 : vector<4x256xf32>
    %130 = arith.addf %124, %129 : vector<4x256xf32>
    %131 = vector.extract_strided_slice %119 {offsets = [0, 2], sizes = [4, 1], strides = [1, 1]} : vector<4x4xf32> to vector<4x1xf32>
    %132 = vector.extract_strided_slice %117 {offsets = [2, 0], sizes = [1, 256], strides = [1, 1]} : vector<4x256xf32> to vector<1x256xf32>
    %133 = vector.broadcast %131 : vector<4x1xf32> to vector<4x256xf32>
    %134 = vector.broadcast %132 : vector<1x256xf32> to vector<4x256xf32>
    %135 = arith.mulf %133, %134 : vector<4x256xf32>
    %136 = arith.addf %130, %135 : vector<4x256xf32>
    %137 = vector.extract_strided_slice %119 {offsets = [0, 3], sizes = [4, 1], strides = [1, 1]} : vector<4x4xf32> to vector<4x1xf32>
    %138 = vector.extract_strided_slice %117 {offsets = [3, 0], sizes = [1, 256], strides = [1, 1]} : vector<4x256xf32> to vector<1x256xf32>
    %139 = vector.broadcast %137 : vector<4x1xf32> to vector<4x256xf32>
    %140 = vector.broadcast %138 : vector<1x256xf32> to vector<4x256xf32>
    %141 = arith.mulf %139, %140 : vector<4x256xf32>
    %142 = arith.addf %136, %141 : vector<4x256xf32>
    %143 = arith.addf %93, %142 : vector<4x256xf32>
    %c1_i32_37 = arith.constant 1 : i32
    %144 = tpu.dynamic_rotate %142 by %c1_i32_37 dim 1 : vector<4x256xf32>, i32 -> vector<4x256xf32>
    %cst_38 = arith.constant 0xFF800000 : f32
    %145 = vector.shape_cast %11 : vector<1x256xi1> to vector<1x256xi1>
    %146 = vector.broadcast %145 : vector<1x256xi1> to vector<4x256xi1>
    %147 = vector.broadcast %cst_38 : f32 to vector<4x256xf32>
    %148 = arith.select %146, %144, %147 : vector<4x256xi1>, vector<4x256xf32>
    %149 = arith.maximumf %142, %148 : vector<4x256xf32>
    %c255_i32_39 = arith.constant 255 : i32
    %150 = tpu.dynamic_rotate %142 by %c255_i32_39 dim 1 : vector<4x256xf32>, i32 -> vector<4x256xf32>
    %cst_40 = arith.constant 0xFF800000 : f32
    %151 = vector.shape_cast %21 : vector<1x256xi1> to vector<1x256xi1>
    %152 = vector.broadcast %151 : vector<1x256xi1> to vector<4x256xi1>
    %153 = vector.broadcast %cst_40 : f32 to vector<4x256xf32>
    %154 = arith.select %152, %150, %153 : vector<4x256xi1>, vector<4x256xf32>
    %155 = arith.maximumf %149, %154 : vector<4x256xf32>
    %c16_i32_41 = arith.constant 16 : i32
    %156 = tpu.dynamic_rotate %155 by %c16_i32_41 dim 1 : vector<4x256xf32>, i32 -> vector<4x256xf32>
    %cst_42 = arith.constant 0xFF800000 : f32
    %157 = vector.shape_cast %31 : vector<1x256xi1> to vector<1x256xi1>
    %158 = vector.broadcast %157 : vector<1x256xi1> to vector<4x256xi1>
    %159 = vector.broadcast %cst_42 : f32 to vector<4x256xf32>
    %160 = arith.select %158, %156, %159 : vector<4x256xi1>, vector<4x256xf32>
    %161 = arith.maximumf %155, %160 : vector<4x256xf32>
    %c240_i32_43 = arith.constant 240 : i32
    %162 = tpu.dynamic_rotate %155 by %c240_i32_43 dim 1 : vector<4x256xf32>, i32 -> vector<4x256xf32>
    %cst_44 = arith.constant 0xFF800000 : f32
    %163 = vector.shape_cast %41 : vector<1x256xi1> to vector<1x256xi1>
    %164 = vector.broadcast %163 : vector<1x256xi1> to vector<4x256xi1>
    %165 = vector.broadcast %cst_44 : f32 to vector<4x256xf32>
    %166 = arith.select %164, %162, %165 : vector<4x256xi1>, vector<4x256xf32>
    %167 = arith.maximumf %161, %166 : vector<4x256xf32>
    %c2 = arith.constant 2 : index
    %c0_45 = arith.constant 0 : index
    %c0_46 = arith.constant 0 : index
    %168 = vector.load %arg2[%c2, %c0_45, %c0_46] : memref<4x4x4xf32, #tpu.memory_space<vmem>>, vector<1x4x4xf32>
    %169 = vector.shape_cast %168 : vector<1x4x4xf32> to vector<4x4xf32>
    %170 = vector.extract_strided_slice %169 {offsets = [0, 0], sizes = [4, 1], strides = [1, 1]} : vector<4x4xf32> to vector<4x1xf32>
    %171 = vector.extract_strided_slice %167 {offsets = [0, 0], sizes = [1, 256], strides = [1, 1]} : vector<4x256xf32> to vector<1x256xf32>
    %172 = vector.broadcast %170 : vector<4x1xf32> to vector<4x256xf32>
    %173 = vector.broadcast %171 : vector<1x256xf32> to vector<4x256xf32>
    %174 = arith.mulf %172, %173 : vector<4x256xf32>
    %175 = vector.extract_strided_slice %169 {offsets = [0, 1], sizes = [4, 1], strides = [1, 1]} : vector<4x4xf32> to vector<4x1xf32>
    %176 = vector.extract_strided_slice %167 {offsets = [1, 0], sizes = [1, 256], strides = [1, 1]} : vector<4x256xf32> to vector<1x256xf32>
    %177 = vector.broadcast %175 : vector<4x1xf32> to vector<4x256xf32>
    %178 = vector.broadcast %176 : vector<1x256xf32> to vector<4x256xf32>
    %179 = arith.mulf %177, %178 : vector<4x256xf32>
    %180 = arith.addf %174, %179 : vector<4x256xf32>
    %181 = vector.extract_strided_slice %169 {offsets = [0, 2], sizes = [4, 1], strides = [1, 1]} : vector<4x4xf32> to vector<4x1xf32>
    %182 = vector.extract_strided_slice %167 {offsets = [2, 0], sizes = [1, 256], strides = [1, 1]} : vector<4x256xf32> to vector<1x256xf32>
    %183 = vector.broadcast %181 : vector<4x1xf32> to vector<4x256xf32>
    %184 = vector.broadcast %182 : vector<1x256xf32> to vector<4x256xf32>
    %185 = arith.mulf %183, %184 : vector<4x256xf32>
    %186 = arith.addf %180, %185 : vector<4x256xf32>
    %187 = vector.extract_strided_slice %169 {offsets = [0, 3], sizes = [4, 1], strides = [1, 1]} : vector<4x4xf32> to vector<4x1xf32>
    %188 = vector.extract_strided_slice %167 {offsets = [3, 0], sizes = [1, 256], strides = [1, 1]} : vector<4x256xf32> to vector<1x256xf32>
    %189 = vector.broadcast %187 : vector<4x1xf32> to vector<4x256xf32>
    %190 = vector.broadcast %188 : vector<1x256xf32> to vector<4x256xf32>
    %191 = arith.mulf %189, %190 : vector<4x256xf32>
    %192 = arith.addf %186, %191 : vector<4x256xf32>
    %193 = arith.addf %143, %192 : vector<4x256xf32>
    %c1_i32_47 = arith.constant 1 : i32
    %194 = tpu.dynamic_rotate %192 by %c1_i32_47 dim 1 : vector<4x256xf32>, i32 -> vector<4x256xf32>
    %cst_48 = arith.constant 0xFF800000 : f32
    %195 = vector.shape_cast %11 : vector<1x256xi1> to vector<1x256xi1>
    %196 = vector.broadcast %195 : vector<1x256xi1> to vector<4x256xi1>
    %197 = vector.broadcast %cst_48 : f32 to vector<4x256xf32>
    %198 = arith.select %196, %194, %197 : vector<4x256xi1>, vector<4x256xf32>
    %199 = arith.maximumf %192, %198 : vector<4x256xf32>
    %c255_i32_49 = arith.constant 255 : i32
    %200 = tpu.dynamic_rotate %192 by %c255_i32_49 dim 1 : vector<4x256xf32>, i32 -> vector<4x256xf32>
    %cst_50 = arith.constant 0xFF800000 : f32
    %201 = vector.shape_cast %21 : vector<1x256xi1> to vector<1x256xi1>
    %202 = vector.broadcast %201 : vector<1x256xi1> to vector<4x256xi1>
    %203 = vector.broadcast %cst_50 : f32 to vector<4x256xf32>
    %204 = arith.select %202, %200, %203 : vector<4x256xi1>, vector<4x256xf32>
    %205 = arith.maximumf %199, %204 : vector<4x256xf32>
    %c16_i32_51 = arith.constant 16 : i32
    %206 = tpu.dynamic_rotate %205 by %c16_i32_51 dim 1 : vector<4x256xf32>, i32 -> vector<4x256xf32>
    %cst_52 = arith.constant 0xFF800000 : f32
    %207 = vector.shape_cast %31 : vector<1x256xi1> to vector<1x256xi1>
    %208 = vector.broadcast %207 : vector<1x256xi1> to vector<4x256xi1>
    %209 = vector.broadcast %cst_52 : f32 to vector<4x256xf32>
    %210 = arith.select %208, %206, %209 : vector<4x256xi1>, vector<4x256xf32>
    %211 = arith.maximumf %205, %210 : vector<4x256xf32>
    %c240_i32_53 = arith.constant 240 : i32
    %212 = tpu.dynamic_rotate %205 by %c240_i32_53 dim 1 : vector<4x256xf32>, i32 -> vector<4x256xf32>
    %cst_54 = arith.constant 0xFF800000 : f32
    %213 = vector.shape_cast %41 : vector<1x256xi1> to vector<1x256xi1>
    %214 = vector.broadcast %213 : vector<1x256xi1> to vector<4x256xi1>
    %215 = vector.broadcast %cst_54 : f32 to vector<4x256xf32>
    %216 = arith.select %214, %212, %215 : vector<4x256xi1>, vector<4x256xf32>
    %217 = arith.maximumf %211, %216 : vector<4x256xf32>
    %c3 = arith.constant 3 : index
    %c0_55 = arith.constant 0 : index
    %c0_56 = arith.constant 0 : index
    %218 = vector.load %arg2[%c3, %c0_55, %c0_56] : memref<4x4x4xf32, #tpu.memory_space<vmem>>, vector<1x4x4xf32>
    %219 = vector.shape_cast %218 : vector<1x4x4xf32> to vector<4x4xf32>
    %220 = vector.extract_strided_slice %219 {offsets = [0, 0], sizes = [4, 1], strides = [1, 1]} : vector<4x4xf32> to vector<4x1xf32>
    %221 = vector.extract_strided_slice %217 {offsets = [0, 0], sizes = [1, 256], strides = [1, 1]} : vector<4x256xf32> to vector<1x256xf32>
    %222 = vector.broadcast %220 : vector<4x1xf32> to vector<4x256xf32>
    %223 = vector.broadcast %221 : vector<1x256xf32> to vector<4x256xf32>
    %224 = arith.mulf %222, %223 : vector<4x256xf32>
    %225 = vector.extract_strided_slice %219 {offsets = [0, 1], sizes = [4, 1], strides = [1, 1]} : vector<4x4xf32> to vector<4x1xf32>
    %226 = vector.extract_strided_slice %217 {offsets = [1, 0], sizes = [1, 256], strides = [1, 1]} : vector<4x256xf32> to vector<1x256xf32>
    %227 = vector.broadcast %225 : vector<4x1xf32> to vector<4x256xf32>
    %228 = vector.broadcast %226 : vector<1x256xf32> to vector<4x256xf32>
    %229 = arith.mulf %227, %228 : vector<4x256xf32>
    %230 = arith.addf %224, %229 : vector<4x256xf32>
    %231 = vector.extract_strided_slice %219 {offsets = [0, 2], sizes = [4, 1], strides = [1, 1]} : vector<4x4xf32> to vector<4x1xf32>
    %232 = vector.extract_strided_slice %217 {offsets = [2, 0], sizes = [1, 256], strides = [1, 1]} : vector<4x256xf32> to vector<1x256xf32>
    %233 = vector.broadcast %231 : vector<4x1xf32> to vector<4x256xf32>
    %234 = vector.broadcast %232 : vector<1x256xf32> to vector<4x256xf32>
    %235 = arith.mulf %233, %234 : vector<4x256xf32>
    %236 = arith.addf %230, %235 : vector<4x256xf32>
    %237 = vector.extract_strided_slice %219 {offsets = [0, 3], sizes = [4, 1], strides = [1, 1]} : vector<4x4xf32> to vector<4x1xf32>
    %238 = vector.extract_strided_slice %217 {offsets = [3, 0], sizes = [1, 256], strides = [1, 1]} : vector<4x256xf32> to vector<1x256xf32>
    %239 = vector.broadcast %237 : vector<4x1xf32> to vector<4x256xf32>
    %240 = vector.broadcast %238 : vector<1x256xf32> to vector<4x256xf32>
    %241 = arith.mulf %239, %240 : vector<4x256xf32>
    %242 = arith.addf %236, %241 : vector<4x256xf32>
    %243 = arith.addf %193, %242 : vector<4x256xf32>
    %c0_57 = arith.constant 0 : index
    %c0_58 = arith.constant 0 : index
    %c0_59 = arith.constant 0 : index
    %244 = vector.load %arg5[%c0_57, %c0_58, %c0_59] : memref<1x4x256xf32, #tpu.memory_space<vmem>>, vector<1x4x256xf32>
    %245 = vector.shape_cast %244 : vector<1x4x256xf32> to vector<4x256xf32>
    %246 = vector.shape_cast %243 : vector<4x256xf32> to vector<1x4x256xf32>
    tpu.vector_store %arg5[%c0_57, %c0_58, %c0_59], %246 {strides = array<i32>} : memref<1x4x256xf32, #tpu.memory_space<vmem>>, vector<1x4x256xf32>,
    return
  }
  func.func @transform_0(%arg0: i32) -> (i32, i32, i32) {
    %c0_i32 = arith.constant 0 : i32
    %c0_i32_0 = arith.constant 0 : i32
    %c0_i32_1 = arith.constant 0 : i32
    return %arg0, %c0_i32, %c0_i32_0 : i32, i32, i32
  }
  func.func @transform_1(%arg0: i32) -> (i32, i32, i32) {
    %c0_i32 = arith.constant 0 : i32
    %c0_i32_0 = arith.constant 0 : i32
    %c0_i32_1 = arith.constant 0 : i32
    %c0_i32_2 = arith.constant 0 : i32
    return %c0_i32, %c0_i32_0, %c0_i32_1 : i32, i32, i32
  }
  func.func @transform_2(%arg0: i32) -> (i32, i32) {
    %c0_i32 = arith.constant 0 : i32
    %c0_i32_0 = arith.constant 0 : i32
    %c0_i32_1 = arith.constant 0 : i32
    return %c0_i32, %c0_i32_0 : i32, i32
  }
  func.func @transform_3(%arg0: i32) -> (i32, i32) {
    %c0_i32 = arith.constant 0 : i32
    %c0_i32_0 = arith.constant 0 : i32
    %c0_i32_1 = arith.constant 0 : i32
    return %c0_i32, %c0_i32_0 : i32, i32
  }
  func.func @transform_4(%arg0: i32) -> (i32, i32, i32) {
    %c0_i32 = arith.constant 0 : i32
    %c0_i32_0 = arith.constant 0 : i32
    %c0_i32_1 = arith.constant 0 : i32
    return %arg0, %c0_i32, %c0_i32_0 : i32, i32, i32
  }
}

</mosaic_0001>

<llo_original>
// kernel: tpu_custom_call.1
$region0: #{tpu_custom_call.1}
  #allocation0 [shape = 'u32[]', space=smem, size = 0x4, offset = 0x4, fixed_abs, tag = 'smem constant byte address 0x4 - core index']
  #allocation1 [shape = 'u32[144,128]{1,0:T(1,128)}', space=vmem, size = 0x12000, scoped, tag = 'internal scratch']
  %s0 = inlined_call_operand.hbm [shape: f32[2,4,256], index: 0, kind: input, shape index: {}]
  %s1 = inlined_call_operand.hbm [shape: f32[4,4,4], index: 1, kind: input, shape index: {}]
  %s2 = inlined_call_operand.vmem [shape: s32[1,256], index: 2, kind: input, shape index: {}]
  %s3 = inlined_call_operand.vmem [shape: s32[1,256], index: 3, kind: input, shape index: {}]
  %s4 = inlined_call_operand.hbm [shape: f32[2,4,256], index: 4, kind: output, shape index: {}]
  %s5 = sld [smem:[#allocation0]]
  $region57: #{tpu_custom_call.1} parent=0
    _
  %s7 = ssub.s32 1, %s5
  %s8 = scalar_select 0, %s7, %s5
  $region1: #{tpu_custom_call.1} parent=0
    #allocation2 [shape = 'u8[8192]{0}', space=vmem, size = 0x2000, scoped, tag = 'input window, operand 0']
    #allocation3 [shape = 's32[2]{0}', space=sflag, size = 0x8, scoped, tag = 'scoped memory for tpu_custom_call.1']
    #allocation4 [shape = 's32[2]{0}', space=sflag, size = 0x8, scoped, tag = 'scoped memory for tpu_custom_call.1']
    #allocation5 [shape = 'u8[8192]{0}', space=vmem, size = 0x2000, scoped, tag = 'input window, operand 1, single buffered']
    #allocation6 [shape = 's32[1]{0}', space=sflag, size = 0x4, scoped, tag = 'scoped memory for tpu_custom_call.1']
    #allocation7 [shape = 'u8[8192]{0}', space=vmem, size = 0x2000, scoped, tag = 'output window, operand 0']
    %9 = vsyncpa [#allocation3], 0
    %s10 = scalar_lea.sflag [#allocation3], 1
    %11 = vsyncpa %s10, 0
    %12 = vsyncpa [#allocation6], 0
    %13 = vsyncpa [#allocation4], 0
    %s14 = scalar_lea.sflag [#allocation4], 1
    %15 = vsyncpa %s14, 0
    loop: start=0, step=1, limit=4
    $region2: #{tpu_custom_call.1} parent=1 // loop_pre_header
      _
    $region3: #{tpu_custom_call.1} parent=1 // loop_header
      %s17 = sphi 0, %s21
      %p18 = scmp.ge.s32.totalorder %s17, 4
      %s27 = sphi 0, %s29
      %s30 = sphi 0, %s27
      %s31 = sphi 0, %s30
      %s47 = sphi 0, %s31
      %s51 = sphi 0, %s51
      %s53 = sphi 0, %s51
      %s54 = sphi 0, %s53
      %s68 = sphi 0, %s54
      %s72 = sphi 0, %s72
      %s74 = sphi 0, %s72
      %s75 = sphi 0, %s74
      %s89 = sphi 0, %s75
      %s93 = sphi 0, %s93
      %s95 = sphi 0, %s93
      %s96 = sphi 0, %s95
      %s110 = sphi 0, %s96
      %s116 = sphi 0, %s118
      %s119 = sphi 0, %s116
      %s120 = sphi 0, %s119
      %s136 = sphi 0, %s120
    $region4: #{tpu_custom_call.1} parent=1 // loop_header_branch
      %20 = sbr.rel (%p18) target = $region8
    $region5: #{tpu_custom_call.1} parent=1 // loop_body
      %s22 = ssub.s32 %s17, 1
      %s23 = ssub.s32 %s17, 2
      %s24 = sadd.s32 %s17, 1
      %s25 = ssub.s32 %s17, %s24
      %p26 = scmp.eq.s32.totalorder %s25, 0
      %s28 = sadd.s32 %s27, 1
      %s29 = scalar_select %p26, %s27, %s28
      %p32 = pneg %p26
      %p33 = scmp.eq.s32.totalorder %s17, 1
      %p34 = por %p32, %p33
      %p35 = scmp.ne.s32.totalorder %s27, %s30
      %p36 = scmp.eq.s32.totalorder %s17, 0
      %p37 = por %p35, %p36
      %p38 = scmp.ne.s32.totalorder %s27, %s30
      %p39 = scmp.eq.s32.totalorder %s22, 1
      %p40 = por %p38, %p39
      %p41 = scmp.ne.s32.totalorder %s30, %s31
      %p42 = scmp.eq.s32.totalorder %s22, 0
      %p43 = por %p41, %p42
      %p44 = scmp.ne.s32.totalorder %s30, %s31
      %p45 = scmp.eq.s32.totalorder %s23, 1
      %p46 = por %p44, %p45
      %p48 = scmp.ne.s32.totalorder %s31, %s47
      %p49 = scmp.eq.s32.totalorder %s23, 0
      %p50 = por %p48, %p49
      %s52 = sadd.s32 %s51, 1
      %p55 = scmp.eq.s32.totalorder %s17, 1
      %p56 = scmp.ne.s32.totalorder %s51, %s53
      %p57 = scmp.eq.s32.totalorder %s17, 0
      %p58 = por %p56, %p57
      %p59 = scmp.ne.s32.totalorder %s51, %s53
      %p60 = scmp.eq.s32.totalorder %s22, 1
      %p61 = por %p59, %p60
      %p62 = scmp.ne.s32.totalorder %s53, %s54
      %p63 = scmp.eq.s32.totalorder %s22, 0
      %p64 = por %p62, %p63
      %p65 = scmp.ne.s32.totalorder %s53, %s54
      %p66 = scmp.eq.s32.totalorder %s23, 1
      %p67 = por %p65, %p66
      %p69 = scmp.ne.s32.totalorder %s54, %s68
      %p70 = scmp.eq.s32.totalorder %s23, 0
      %p71 = por %p69, %p70
      %s73 = sadd.s32 %s72, 1
      %p76 = scmp.eq.s32.totalorder %s17, 1
      %p77 = scmp.ne.s32.totalorder %s72, %s74
      %p78 = scmp.eq.s32.totalorder %s17, 0
      %p79 = por %p77, %p78
      %p80 = scmp.ne.s32.totalorder %s72, %s74
      %p81 = scmp.eq.s32.totalorder %s22, 1
      %p82 = por %p80, %p81
      %p83 = scmp.ne.s32.totalorder %s74, %s75
      %p84 = scmp.eq.s32.totalorder %s22, 0
      %p85 = por %p83, %p84
      %p86 = scmp.ne.s32.totalorder %s74, %s75
      %p87 = scmp.eq.s32.totalorder %s23, 1
      %p88 = por %p86, %p87
      %p90 = scmp.ne.s32.totalorder %s75, %s89
      %p91 = scmp.eq.s32.totalorder %s23, 0
      %p92 = por %p90, %p91
      %s94 = sadd.s32 %s93, 1
      %p97 = scmp.eq.s32.totalorder %s17, 1
      %p98 = scmp.ne.s32.totalorder %s93, %s95
      %p99 = scmp.eq.s32.totalorder %s17, 0
      %p100 = por %p98, %p99
      %p101 = scmp.ne.s32.totalorder %s93, %s95
      %p102 = scmp.eq.s32.totalorder %s22, 1
      %p103 = por %p101, %p102
      %p104 = scmp.ne.s32.totalorder %s95, %s96
      %p105 = scmp.eq.s32.totalorder %s22, 0
      %p106 = por %p104, %p105
      %p107 = scmp.ne.s32.totalorder %s95, %s96
      %p108 = scmp.eq.s32.totalorder %s23, 1
      %p109 = por %p107, %p108
      %p111 = scmp.ne.s32.totalorder %s96, %s110
      %p112 = scmp.eq.s32.totalorder %s23, 0
      %p113 = por %p111, %p112
      %s114 = ssub.s32 %s17, %s24
      %p115 = scmp.eq.s32.totalorder %s114, 0
      %s117 = sadd.s32 %s116, 1
      %s118 = scalar_select %p115, %s116, %s117
      %p121 = pneg %p115
      %p122 = scmp.eq.s32.totalorder %s17, 1
      %p123 = por %p121, %p122
      %p124 = scmp.ne.s32.totalorder %s116, %s119
      %p125 = scmp.eq.s32.totalorder %s17, 0
      %p126 = por %p124, %p125
      %p127 = scmp.ne.s32.totalorder %s116, %s119
      %p128 = scmp.eq.s32.totalorder %s22, 1
      %p129 = por %p127, %p128
      %p130 = scmp.ne.s32.totalorder %s119, %s120
      %p131 = scmp.eq.s32.totalorder %s22, 0
      %p132 = por %p130, %p131
      %p133 = scmp.ne.s32.totalorder %s119, %s120
      %p134 = scmp.eq.s32.totalorder %s23, 1
      %p135 = por %p133, %p134
      %p137 = scmp.ne.s32.totalorder %s120, %s136
      %p138 = scmp.eq.s32.totalorder %s23, 0
      %p139 = por %p137, %p138
      %p140 = scmp.le.s32.totalorder 1, %s17
      %p141 = scmp.lt.s32.totalorder %s17, 3
      %p142 = pnand %p140, %p141
      %p143 = pneg %p142
      // Predicated region
      $region9: #{tpu_custom_call.1} parent=5 // pred_check
        _
      $region10: #{tpu_custom_call.1} parent=5 // pred_check_branch
        %145 = sbr.rel (%p142) target = $region12
      $region11: #{tpu_custom_call.1} parent=5 // pred_region
        %s146 = ssub.s32 %s17, 1
        // Predicated region
        $region13: #{tpu_custom_call.1} parent=11 // pred_check
          %p147 = pneg %p64
        $region14: #{tpu_custom_call.1} parent=11 // pred_check_branch
          %149 = sbr.rel (%p147) target = $region16
        $region15: #{tpu_custom_call.1} parent=11 // pred_region
          %s151 = ssub.s32 256, 256
          %152 = vsyncadd [#allocation6], %s151
          %s153 = sshll.u32 [#allocation5], 4
          %s154 = int_to_ptr.vmem [resolvable:$true] %s153
          %159 = dma.hbm_to_vmem [thread:$0]  %s1, 256, %s154, [#allocation6], 64, 64, 4
        $region16: #{tpu_custom_call.1} parent=11 // pred_fallthru
          _
        // Predicated region
        $region17: #{tpu_custom_call.1} parent=11 // pred_check
          %p160 = pneg %p85
        $region18: #{tpu_custom_call.1} parent=11 // pred_check_branch
          %162 = sbr.rel (%p160) target = $region20
        $region19: #{tpu_custom_call.1} parent=11 // pred_region
          _
        $region20: #{tpu_custom_call.1} parent=11 // pred_fallthru
          _
        // Predicated region
        $region21: #{tpu_custom_call.1} parent=11 // pred_check
          %p163 = pneg %p106
        $region22: #{tpu_custom_call.1} parent=11 // pred_check_branch
          %165 = sbr.rel (%p163) target = $region24
        $region23: #{tpu_custom_call.1} parent=11 // pred_region
          _
        $region24: #{tpu_custom_call.1} parent=11 // pred_fallthru
          _
      $region12: #{tpu_custom_call.1} parent=5 // pred_fallthru
        _
      %p166 = scmp.lt.s32.totalorder %s17, 2
      // Predicated region
      $region25: #{tpu_custom_call.1} parent=5 // pred_check
        %p167 = pneg %p166
      $region26: #{tpu_custom_call.1} parent=5 // pred_check_branch
        %169 = sbr.rel (%p167) target = $region28
      $region27: #{tpu_custom_call.1} parent=5 // pred_region
        // Predicated region
        $region29: #{tpu_custom_call.1} parent=27 // pred_check
          %p170 = pneg %p37
        $region30: #{tpu_custom_call.1} parent=27 // pred_check_branch
          %172 = sbr.rel (%p170) target = $region32
        $region31: #{tpu_custom_call.1} parent=27 // pred_region
          %s173 = sand.u32 %s27, 1
          %s174 = scalar_lea.sflag [#allocation3], %s173
          %s175 = sand.u32 %s27, 1
          %s176 = smul.addr %s175, 8
          %s177 = scalar_lea.vmem [#allocation2], %s176
          %s179 = ssub.s32 128, 128
          %180 = vsyncadd %s174, %s179
          %s181 = smul.addr %s17, 2
          %s182 = smul.addr %s181, 64
          %s183 = scalar_lea.hbm %s0, %s182
          %s185 = sshll.u32 %s177, 4
          %s186 = int_to_ptr.vmem [resolvable:$true] %s185
          %188 = dma.hbm_to_vmem [thread:$0]  %s183, 128, %s186, %s174
        $region32: #{tpu_custom_call.1} parent=27 // pred_fallthru
          _
      $region28: #{tpu_custom_call.1} parent=5 // pred_fallthru
        _
      %p189 = scmp.le.s32.totalorder 1, %s17
      %p190 = scmp.lt.s32.totalorder %s17, 3
      %p191 = pnand %p189, %p190
      %p192 = pneg %p191
      // Predicated region
      $region33: #{tpu_custom_call.1} parent=5 // pred_check
        _
      $region34: #{tpu_custom_call.1} parent=5 // pred_check_branch
        %194 = sbr.rel (%p191) target = $region36
      $region35: #{tpu_custom_call.1} parent=5 // pred_region
        %s195 = ssub.s32 %s17, 1
        %s196 = sand.u32 %s30, 1
        %s197 = scalar_lea.sflag [#allocation3], %s196
        %s198 = sand.u32 %s30, 1
        %s199 = smul.addr %s198, 8
        %s200 = scalar_lea.vmem [#allocation2], %s199
        // Predicated region
        $region37: #{tpu_custom_call.1} parent=35 // pred_check
          %p201 = pneg %p43
        $region38: #{tpu_custom_call.1} parent=35 // pred_check_branch
          %203 = sbr.rel (%p201) target = $region40
        $region39: #{tpu_custom_call.1} parent=35 // pred_region
          %204 = dma.done %s197, 128
        $region40: #{tpu_custom_call.1} parent=35 // pred_fallthru
          _
        // Predicated region
        $region41: #{tpu_custom_call.1} parent=35 // pred_check
          %p205 = pneg %p64
        $region42: #{tpu_custom_call.1} parent=35 // pred_check_branch
          %207 = sbr.rel (%p205) target = $region44
        $region43: #{tpu_custom_call.1} parent=35 // pred_region
          %208 = dma.done [#allocation6], 256
        $region44: #{tpu_custom_call.1} parent=35 // pred_fallthru
          _
        %s209 = sand.u32 %s30, 1
        %s210 = scalar_lea.sflag [#allocation3], %s209
        %s211 = sand.u32 %s30, 1
        %s212 = smul.addr %s211, 8
        %s213 = scalar_lea.vmem [#allocation2], %s212
        %p214 = pneg %p43
        %p215 = pneg %p40
        %p216 = pneg %p64
        %p217 = pneg %p61
        %p218 = pneg %p85
        %p219 = pneg %p82
        %p220 = pneg %p106
        %p221 = pneg %p103
        %p222 = pneg %p132
        %p223 = pneg %p129
        %s224 = sand.u32 %s119, 1
        %s225 = scalar_lea.sflag [#allocation4], %s224
        %s226 = sand.u32 %s119, 1
        %s227 = smul.addr %s226, 8
        %s228 = scalar_lea.vmem [#allocation7], %s227
        %v229 = vld [vmem:[%s2] sm:$0x3]
        %v230 = vld [vmem:[%s3] sm:$0x3]
        %v231 = vlaneseq
        %v232 = vshrl.u32 %v231, 7
        %v233 = vsub.s32 0, %v232
        %v234 = vrot.slane %v229, %v233
        %v235 = vlaneseq
        %v236 = vshrl.u32 %v235, 7
        %v237 = vsub.s32 1, %v236
        %v238 = vrot.slane %v229, %v237
        %239 = vrot.lane.b32.xlu0 %v234, 1
        %v240 = vpop.permute.xlu0 %239
        %241 = vrot.lane.b32.xlu0 %v238, 1
        %v242 = vpop.permute.xlu0 %241
        %v243 = vlaneseq
        %v244 = vand.u32 %v243, 127
        %vm245 = vcmp.lt.s32.totalorder %v244, 1
        %v246 = vsel %vm245, %v240, %v242
        %v247 = vsel %vm245, %v242, %v240
        %v248 = vlaneseq
        %v249 = vshrl.u32 %v248, 7
        %v250 = vsub.s32 0, %v249
        %v251 = vrot.slane %v230, %v250
        %v252 = vlaneseq
        %v253 = vshrl.u32 %v252, 7
        %v254 = vsub.s32 1, %v253
        %v255 = vrot.slane %v230, %v254
        %256 = vrot.lane.b32.xlu0 %v251, 1
        %v257 = vpop.permute.xlu0 %256
        %258 = vrot.lane.b32.xlu0 %v255, 1
        %v259 = vpop.permute.xlu0 %258
        %v260 = vsel %vm245, %v257, %v259
        %v261 = vsel %vm245, %v259, %v257
        %vm262 = vcmp.eq.s32.totalorder %v247, %v234
        %vm263 = vcmp.eq.s32.totalorder %v246, %v238
        %v264 = vsub.s32 %v261, %v251
        %v265 = vsub.s32 %v260, %v255
        %vm266 = vcmp.eq.s32.totalorder %v264, 1
        %vm267 = vcmp.eq.s32.totalorder %v265, 1
        %vm268 = vcmp.eq.s32.totalorder %v264, 4294967295
        %vm269 = vcmp.eq.s32.totalorder %v265, 4294967295
        %vm270 = vmor %vm266, %vm268
        %vm271 = vmor %vm267, %vm269
        %vm272 = vmand %vm262, %vm270
        %vm273 = vmand %vm263, %vm271
        %274 = vrot.lane.b32.xlu0 %v234, 127
        %v275 = vpop.permute.xlu0 %274
        %276 = vrot.lane.b32.xlu0 %v238, 127
        %v277 = vpop.permute.xlu0 %276
        %vm278 = vcmp.lt.s32.totalorder %v244, 127
        %v279 = vsel %vm278, %v275, %v277
        %v280 = vsel %vm278, %v277, %v275
        %281 = vrot.lane.b32.xlu0 %v251, 127
        %v282 = vpop.permute.xlu0 %281
        %283 = vrot.lane.b32.xlu0 %v255, 127
        %v284 = vpop.permute.xlu0 %283
        %v285 = vsel %vm278, %v282, %v284
        %v286 = vsel %vm278, %v284, %v282
        %vm287 = vcmp.eq.s32.totalorder %v279, %v234
        %vm288 = vcmp.eq.s32.totalorder %v280, %v238
        %v289 = vsub.s32 %v285, %v251
        %v290 = vsub.s32 %v286, %v255
        %vm291 = vcmp.eq.s32.totalorder %v289, 1
        %vm292 = vcmp.eq.s32.totalorder %v290, 1
        %vm293 = vcmp.eq.s32.totalorder %v289, 4294967295
        %vm294 = vcmp.eq.s32.totalorder %v290, 4294967295
        %vm295 = vmor %vm291, %vm293
        %vm296 = vmor %vm292, %vm294
        %vm297 = vmand %vm287, %vm295
        %vm298 = vmand %vm288, %vm296
        %299 = vrot.lane.b32.xlu0 %v234, 16
        %v300 = vpop.permute.xlu0 %299
        %301 = vrot.lane.b32.xlu0 %v238, 16
        %v302 = vpop.permute.xlu0 %301
        %vm303 = vcmp.lt.s32.totalorder %v244, 16
        %v304 = vsel %vm303, %v300, %v302
        %v305 = vsel %vm303, %v302, %v300
        %306 = vrot.lane.b32.xlu0 %v251, 16
        %v307 = vpop.permute.xlu0 %306
        %308 = vrot.lane.b32.xlu0 %v255, 16
        %v309 = vpop.permute.xlu0 %308
        %v310 = vsel %vm303, %v307, %v309
        %v311 = vsel %vm303, %v309, %v307
        %vm312 = vcmp.eq.s32.totalorder %v311, %v251
        %vm313 = vcmp.eq.s32.totalorder %v310, %v255
        %v314 = vsub.s32 %v305, %v234
        %v315 = vsub.s32 %v304, %v238
        %vm316 = vcmp.eq.s32.totalorder %v314, 1
        %vm317 = vcmp.eq.s32.totalorder %v315, 1
        %vm318 = vcmp.eq.s32.totalorder %v314, 4294967295
        %vm319 = vcmp.eq.s32.totalorder %v315, 4294967295
        %vm320 = vmor %vm316, %vm318
        %vm321 = vmor %vm317, %vm319
        %vm322 = vmand %vm312, %vm320
        %vm323 = vmand %vm313, %vm321
        %324 = vrot.lane.b32.xlu0 %v234, 112
        %v325 = vpop.permute.xlu0 %324
        %326 = vrot.lane.b32.xlu0 %v238, 112
        %v327 = vpop.permute.xlu0 %326
        %vm328 = vcmp.lt.s32.totalorder %v244, 112
        %v329 = vsel %vm328, %v325, %v327
        %v330 = vsel %vm328, %v327, %v325
        %331 = vrot.lane.b32.xlu0 %v251, 112
        %v332 = vpop.permute.xlu0 %331
        %333 = vrot.lane.b32.xlu0 %v255, 112
        %v334 = vpop.permute.xlu0 %333
        %v335 = vsel %vm328, %v332, %v334
        %v336 = vsel %vm328, %v334, %v332
        %vm337 = vcmp.eq.s32.totalorder %v335, %v251
        %vm338 = vcmp.eq.s32.totalorder %v336, %v255
        %v339 = vsub.s32 %v329, %v234
        %v340 = vsub.s32 %v330, %v238
        %vm341 = vcmp.eq.s32.totalorder %v339, 1
        %vm342 = vcmp.eq.s32.totalorder %v340, 1
        %vm343 = vcmp.eq.s32.totalorder %v339, 4294967295
        %vm344 = vcmp.eq.s32.totalorder %v340, 4294967295
        %vm345 = vmor %vm341, %vm343
        %vm346 = vmor %vm342, %vm344
        %vm347 = vmand %vm337, %vm345
        %vm348 = vmand %vm338, %vm346
        %v349 = vld [vmem:[%s200] sm:$0xff]
        %v351 = vcombine.high %v349, %v349
        %353 = vrot.lane.b32.xlu0 %v349, 1
        %v354 = vpop.permute.xlu0 %353
        %355 = vrot.lane.b32.xlu0 %v351, 1
        %v356 = vpop.permute.xlu0 %355
        %v357 = vsel %vm245, %v354, %v356
        %v358 = vsel %vm245, %v356, %v354
        %v359 = vsel %vm272, 1, 0
        %v360 = vsel %vm273, 1, 0
        %v361 = vlaneseq
        %v362 = vshrl.u32 %v361, 7
        %v363 = vsub.s32 0, %v362
        %v364 = vrot.slane %v359, %v363
        %v365 = vlaneseq
        %v366 = vshrl.u32 %v365, 7
        %v367 = vsub.s32 0, %v366
        %v368 = vrot.slane %v360, %v367
        %vm369 = vcmp.eq.s32.totalorder %v364, 1
        %vm370 = vcmp.eq.s32.totalorder %v368, 1
        %v371 = vsel %vm369, %v358, -inf
        %v372 = vsel %vm370, %v357, -inf
        %v375 = vcombine.low %v371, %v372
        %v377 = vmax.f32 %v349, %v375
        %378 = vrot.lane.b32.xlu0 %v349, 127
        %v379 = vpop.permute.xlu0 %378
        %380 = vrot.lane.b32.xlu0 %v351, 127
        %v381 = vpop.permute.xlu0 %380
        %v382 = vsel %vm278, %v379, %v381
        %v383 = vsel %vm278, %v381, %v379
        %v384 = vsel %vm297, 1, 0
        %v385 = vsel %vm298, 1, 0
        %v386 = vlaneseq
        %v387 = vshrl.u32 %v386, 7
        %v388 = vsub.s32 0, %v387
        %v389 = vrot.slane %v384, %v388
        %v390 = vlaneseq
        %v391 = vshrl.u32 %v390, 7
        %v392 = vsub.s32 0, %v391
        %v393 = vrot.slane %v385, %v392
        %vm394 = vcmp.eq.s32.totalorder %v389, 1
        %vm395 = vcmp.eq.s32.totalorder %v393, 1
        %v396 = vsel %vm394, %v382, -inf
        %v397 = vsel %vm395, %v383, -inf
        %v400 = vcombine.low %v396, %v397
        %v402 = vmax.f32 %v377, %v400
        %v404 = vcombine.high %v402, %v402
        %406 = vrot.lane.b32.xlu0 %v402, 16
        %v407 = vpop.permute.xlu0 %406
        %408 = vrot.lane.b32.xlu0 %v404, 16
        %v409 = vpop.permute.xlu0 %408
        %v410 = vsel %vm303, %v407, %v409
        %v411 = vsel %vm303, %v409, %v407
        %v412 = vsel %vm322, 1, 0
        %v413 = vsel %vm323, 1, 0
        %v414 = vlaneseq
        %v415 = vshrl.u32 %v414, 7
        %v416 = vsub.s32 0, %v415
        %v417 = vrot.slane %v412, %v416
        %v418 = vlaneseq
        %v419 = vshrl.u32 %v418, 7
        %v420 = vsub.s32 0, %v419
        %v421 = vrot.slane %v413, %v420
        %vm422 = vcmp.eq.s32.totalorder %v417, 1
        %vm423 = vcmp.eq.s32.totalorder %v421, 1
        %v424 = vsel %vm422, %v411, -inf
        %v425 = vsel %vm423, %v410, -inf
        %v428 = vcombine.low %v424, %v425
        %v430 = vmax.f32 %v402, %v428
        %431 = vrot.lane.b32.xlu0 %v402, 112
        %v432 = vpop.permute.xlu0 %431
        %433 = vrot.lane.b32.xlu0 %v404, 112
        %v434 = vpop.permute.xlu0 %433
        %v435 = vsel %vm328, %v432, %v434
        %v436 = vsel %vm328, %v434, %v432
        %v437 = vsel %vm347, 1, 0
        %v438 = vsel %vm348, 1, 0
        %v439 = vlaneseq
        %v440 = vshrl.u32 %v439, 7
        %v441 = vsub.s32 0, %v440
        %v442 = vrot.slane %v437, %v441
        %v443 = vlaneseq
        %v444 = vshrl.u32 %v443, 7
        %v445 = vsub.s32 0, %v444
        %v446 = vrot.slane %v438, %v445
        %vm447 = vcmp.eq.s32.totalorder %v442, 1
        %vm448 = vcmp.eq.s32.totalorder %v446, 1
        %v449 = vsel %vm447, %v435, -inf
        %v450 = vsel %vm448, %v436, -inf
        %v453 = vcombine.low %v449, %v450
        %v455 = vmax.f32 %v430, %v453
        %v456 = vld [vmem:[#allocation5] sm:$0xf]
        %458 = vset.pattern.permute.xlu0 0
        %459 = vperm.xlu0 %458, %v456
        %v460 = vpop.permute.xlu0 %459
        %v463 = vlaneseq
        %v464 = vshrl.u32 %v463, 7
        %v465 = vsub.s32 0, %v464
        %v466 = vrot.slane %v455, %v465
        %v467 = vlaneseq
        %v468 = vshrl.u32 %v467, 7
        %v469 = vsub.s32 4, %v468
        %v470 = vrot.slane %v455, %v469
        %v473 = vlaneseq
        %v474 = vshrl.u32 %v473, 7
        %v475 = vsub.s32 0, %v474
        %v476 = vrot.slane %v466, %v475
        %v477 = vlaneseq
        %v478 = vshrl.u32 %v477, 7
        %v479 = vsub.s32 0, %v478
        %v480 = vrot.slane %v470, %v479
        %v481 = vmul.f32 %v460, %v476
        %v482 = vmul.f32 %v460, %v480
        %483 = vset.pattern.permute.xlu0 1
        %484 = vperm.xlu0 %483, %v456
        %v485 = vpop.permute.xlu0 %484
        %v487 = vlaneseq
        %v488 = vshrl.u32 %v487, 7
        %v489 = vsub.s32 1, %v488
        %v490 = vrot.slane %v455, %v489
        %v491 = vlaneseq
        %v492 = vshrl.u32 %v491, 7
        %v493 = vsub.s32 5, %v492
        %v494 = vrot.slane %v455, %v493
        %v497 = vlaneseq
        %v498 = vshrl.u32 %v497, 7
        %v499 = vsub.s32 1, %v498
        %v500 = vrot.slane %v490, %v499
        %v501 = vlaneseq
        %v502 = vshrl.u32 %v501, 7
        %v503 = vsub.s32 1, %v502
        %v504 = vrot.slane %v494, %v503
        %v505 = vmul.f32 %v485, %v500
        %v506 = vmul.f32 %v485, %v504
        %v507 = vadd.f32 %v481, %v505
        %v508 = vadd.f32 %v482, %v506
        %509 = vset.pattern.permute.xlu0 2
        %510 = vperm.xlu0 %509, %v456
        %v511 = vpop.permute.xlu0 %510
        %v513 = vlaneseq
        %v514 = vshrl.u32 %v513, 7
        %v515 = vsub.s32 2, %v514
        %v516 = vrot.slane %v455, %v515
        %v517 = vlaneseq
        %v518 = vshrl.u32 %v517, 7
        %v519 = vsub.s32 6, %v518
        %v520 = vrot.slane %v455, %v519
        %v523 = vlaneseq
        %v524 = vshrl.u32 %v523, 7
        %v525 = vsub.s32 2, %v524
        %v526 = vrot.slane %v516, %v525
        %v527 = vlaneseq
        %v528 = vshrl.u32 %v527, 7
        %v529 = vsub.s32 2, %v528
        %v530 = vrot.slane %v520, %v529
        %v531 = vmul.f32 %v511, %v526
        %v532 = vmul.f32 %v511, %v530
        %v533 = vadd.f32 %v507, %v531
        %v534 = vadd.f32 %v508, %v532
        %535 = vset.pattern.permute.xlu0 3
        %536 = vperm.xlu0 %535, %v456
        %v537 = vpop.permute.xlu0 %536
        %v539 = vlaneseq
        %v540 = vshrl.u32 %v539, 7
        %v541 = vsub.s32 3, %v540
        %v542 = vrot.slane %v455, %v541
        %v543 = vlaneseq
        %v544 = vshrl.u32 %v543, 7
        %v545 = vsub.s32 7, %v544
        %v546 = vrot.slane %v455, %v545
        %v549 = vlaneseq
        %v550 = vshrl.u32 %v549, 7
        %v551 = vsub.s32 3, %v550
        %v552 = vrot.slane %v542, %v551
        %v553 = vlaneseq
        %v554 = vshrl.u32 %v553, 7
        %v555 = vsub.s32 3, %v554
        %v556 = vrot.slane %v546, %v555
        %v557 = vmul.f32 %v537, %v552
        %v558 = vmul.f32 %v537, %v556
        %v559 = vadd.f32 %v533, %v557
        %v560 = vadd.f32 %v534, %v558
        %v563 = vcombine.low %v559, %v560
        %v565 = vadd.f32 %v349, %v563
        %566 = vrot.lane.b32.xlu0 %v559, 1
        %v567 = vpop.permute.xlu0 %566
        %568 = vrot.lane.b32.xlu0 %v560, 1
        %v569 = vpop.permute.xlu0 %568
        %v570 = vsel %vm245, %v567, %v569
        %v571 = vsel %vm245, %v569, %v567
        %v572 = vsel %vm369, %v571, -inf
        %v573 = vsel %vm370, %v570, -inf
        %v574 = vmax.f32 %v559, %v572
        %v575 = vmax.f32 %v560, %v573
        %576 = vrot.lane.b32.xlu0 %v559, 127
        %v577 = vpop.permute.xlu0 %576
        %578 = vrot.lane.b32.xlu0 %v560, 127
        %v579 = vpop.permute.xlu0 %578
        %v580 = vsel %vm278, %v577, %v579
        %v581 = vsel %vm278, %v579, %v577
        %v582 = vsel %vm394, %v580, -inf
        %v583 = vsel %vm395, %v581, -inf
        %v584 = vmax.f32 %v574, %v582
        %v585 = vmax.f32 %v575, %v583
        %586 = vrot.lane.b32.xlu0 %v584, 16
        %v587 = vpop.permute.xlu0 %586
        %588 = vrot.lane.b32.xlu0 %v585, 16
        %v589 = vpop.permute.xlu0 %588
        %v590 = vsel %vm303, %v587, %v589
        %v591 = vsel %vm303, %v589, %v587
        %v592 = vsel %vm422, %v591, -inf
        %v593 = vsel %vm423, %v590, -inf
        %v594 = vmax.f32 %v584, %v592
        %v595 = vmax.f32 %v585, %v593
        %596 = vrot.lane.b32.xlu0 %v584, 112
        %v597 = vpop.permute.xlu0 %596
        %598 = vrot.lane.b32.xlu0 %v585, 112
        %v599 = vpop.permute.xlu0 %598
        %v600 = vsel %vm328, %v597, %v599
        %v601 = vsel %vm328, %v599, %v597
        %v602 = vsel %vm447, %v600, -inf
        %v603 = vsel %vm448, %v601, -inf
        %v604 = vmax.f32 %v594, %v602
        %v605 = vmax.f32 %v595, %v603
        %s606 = scalar_lea.vmem [#allocation5], 4
        %v607 = vld [vmem:[%s606] sm:$0xf]
        %609 = vset.pattern.permute.xlu0 0
        %610 = vperm.xlu0 %609, %v607
        %v611 = vpop.permute.xlu0 %610
        %v613 = vlaneseq
        %v614 = vshrl.u32 %v613, 7
        %v615 = vsub.s32 0, %v614
        %v616 = vrot.slane %v604, %v615
        %v617 = vlaneseq
        %v618 = vshrl.u32 %v617, 7
        %v619 = vsub.s32 0, %v618
        %v620 = vrot.slane %v605, %v619
        %v621 = vmul.f32 %v611, %v616
        %v622 = vmul.f32 %v611, %v620
        %623 = vset.pattern.permute.xlu0 1
        %624 = vperm.xlu0 %623, %v607
        %v625 = vpop.permute.xlu0 %624
        %v627 = vlaneseq
        %v628 = vshrl.u32 %v627, 7
        %v629 = vsub.s32 1, %v628
        %v630 = vrot.slane %v604, %v629
        %v631 = vlaneseq
        %v632 = vshrl.u32 %v631, 7
        %v633 = vsub.s32 1, %v632
        %v634 = vrot.slane %v605, %v633
        %v635 = vmul.f32 %v625, %v630
        %v636 = vmul.f32 %v625, %v634
        %v637 = vadd.f32 %v621, %v635
        %v638 = vadd.f32 %v622, %v636
        %639 = vset.pattern.permute.xlu0 2
        %640 = vperm.xlu0 %639, %v607
        %v641 = vpop.permute.xlu0 %640
        %v643 = vlaneseq
        %v644 = vshrl.u32 %v643, 7
        %v645 = vsub.s32 2, %v644
        %v646 = vrot.slane %v604, %v645
        %v647 = vlaneseq
        %v648 = vshrl.u32 %v647, 7
        %v649 = vsub.s32 2, %v648
        %v650 = vrot.slane %v605, %v649
        %v651 = vmul.f32 %v641, %v646
        %v652 = vmul.f32 %v641, %v650
        %v653 = vadd.f32 %v637, %v651
        %v654 = vadd.f32 %v638, %v652
        %655 = vset.pattern.permute.xlu0 3
        %656 = vperm.xlu0 %655, %v607
        %v657 = vpop.permute.xlu0 %656
        %v659 = vlaneseq
        %v660 = vshrl.u32 %v659, 7
        %v661 = vsub.s32 3, %v660
        %v662 = vrot.slane %v604, %v661
        %v663 = vlaneseq
        %v664 = vshrl.u32 %v663, 7
        %v665 = vsub.s32 3, %v664
        %v666 = vrot.slane %v605, %v665
        %v667 = vmul.f32 %v657, %v662
        %v668 = vmul.f32 %v657, %v666
        %v669 = vadd.f32 %v653, %v667
        %v670 = vadd.f32 %v654, %v668
        %v673 = vcombine.low %v669, %v670
        %v675 = vadd.f32 %v565, %v673
        %676 = vrot.lane.b32.xlu0 %v669, 1
        %v677 = vpop.permute.xlu0 %676
        %678 = vrot.lane.b32.xlu0 %v670, 1
        %v679 = vpop.permute.xlu0 %678
        %v680 = vsel %vm245, %v677, %v679
        %v681 = vsel %vm245, %v679, %v677
        %v682 = vsel %vm369, %v681, -inf
        %v683 = vsel %vm370, %v680, -inf
        %v684 = vmax.f32 %v669, %v682
        %v685 = vmax.f32 %v670, %v683
        %686 = vrot.lane.b32.xlu0 %v669, 127
        %v687 = vpop.permute.xlu0 %686
        %688 = vrot.lane.b32.xlu0 %v670, 127
        %v689 = vpop.permute.xlu0 %688
        %v690 = vsel %vm278, %v687, %v689
        %v691 = vsel %vm278, %v689, %v687
        %v692 = vsel %vm394, %v690, -inf
        %v693 = vsel %vm395, %v691, -inf
        %v694 = vmax.f32 %v684, %v692
        %v695 = vmax.f32 %v685, %v693
        %696 = vrot.lane.b32.xlu0 %v694, 16
        %v697 = vpop.permute.xlu0 %696
        %698 = vrot.lane.b32.xlu0 %v695, 16
        %v699 = vpop.permute.xlu0 %698
        %v700 = vsel %vm303, %v697, %v699
        %v701 = vsel %vm303, %v699, %v697
        %v702 = vsel %vm422, %v701, -inf
        %v703 = vsel %vm423, %v700, -inf
        %v704 = vmax.f32 %v694, %v702
        %v705 = vmax.f32 %v695, %v703
        %706 = vrot.lane.b32.xlu0 %v694, 112
        %v707 = vpop.permute.xlu0 %706
        %708 = vrot.lane.b32.xlu0 %v695, 112
        %v709 = vpop.permute.xlu0 %708
        %v710 = vsel %vm328, %v707, %v709
        %v711 = vsel %vm328, %v709, %v707
        %v712 = vsel %vm447, %v710, -inf
        %v713 = vsel %vm448, %v711, -inf
        %v714 = vmax.f32 %v704, %v712
        %v715 = vmax.f32 %v705, %v713
        %s716 = scalar_lea.vmem [#allocation5], 8
        %v717 = vld [vmem:[%s716] sm:$0xf]
        %719 = vset.pattern.permute.xlu0 0
        %720 = vperm.xlu0 %719, %v717
        %v721 = vpop.permute.xlu0 %720
        %v723 = vlaneseq
        %v724 = vshrl.u32 %v723, 7
        %v725 = vsub.s32 0, %v724
        %v726 = vrot.slane %v714, %v725
        %v727 = vlaneseq
        %v728 = vshrl.u32 %v727, 7
        %v729 = vsub.s32 0, %v728
        %v730 = vrot.slane %v715, %v729
        %v731 = vmul.f32 %v721, %v726
        %v732 = vmul.f32 %v721, %v730
        %733 = vset.pattern.permute.xlu0 1
        %734 = vperm.xlu0 %733, %v717
        %v735 = vpop.permute.xlu0 %734
        %v737 = vlaneseq
        %v738 = vshrl.u32 %v737, 7
        %v739 = vsub.s32 1, %v738
        %v740 = vrot.slane %v714, %v739
        %v741 = vlaneseq
        %v742 = vshrl.u32 %v741, 7
        %v743 = vsub.s32 1, %v742
        %v744 = vrot.slane %v715, %v743
        %v745 = vmul.f32 %v735, %v740
        %v746 = vmul.f32 %v735, %v744
        %v747 = vadd.f32 %v731, %v745
        %v748 = vadd.f32 %v732, %v746
        %749 = vset.pattern.permute.xlu0 2
        %750 = vperm.xlu0 %749, %v717
        %v751 = vpop.permute.xlu0 %750
        %v753 = vlaneseq
        %v754 = vshrl.u32 %v753, 7
        %v755 = vsub.s32 2, %v754
        %v756 = vrot.slane %v714, %v755
        %v757 = vlaneseq
        %v758 = vshrl.u32 %v757, 7
        %v759 = vsub.s32 2, %v758
        %v760 = vrot.slane %v715, %v759
        %v761 = vmul.f32 %v751, %v756
        %v762 = vmul.f32 %v751, %v760
        %v763 = vadd.f32 %v747, %v761
        %v764 = vadd.f32 %v748, %v762
        %765 = vset.pattern.permute.xlu0 3
        %766 = vperm.xlu0 %765, %v717
        %v767 = vpop.permute.xlu0 %766
        %v769 = vlaneseq
        %v770 = vshrl.u32 %v769, 7
        %v771 = vsub.s32 3, %v770
        %v772 = vrot.slane %v714, %v771
        %v773 = vlaneseq
        %v774 = vshrl.u32 %v773, 7
        %v775 = vsub.s32 3, %v774
        %v776 = vrot.slane %v715, %v775
        %v777 = vmul.f32 %v767, %v772
        %v778 = vmul.f32 %v767, %v776
        %v779 = vadd.f32 %v763, %v777
        %v780 = vadd.f32 %v764, %v778
        %v783 = vcombine.low %v779, %v780
        %v785 = vadd.f32 %v675, %v783
        %786 = vrot.lane.b32.xlu0 %v779, 1
        %v787 = vpop.permute.xlu0 %786
        %788 = vrot.lane.b32.xlu0 %v780, 1
        %v789 = vpop.permute.xlu0 %788
        %v790 = vsel %vm245, %v787, %v789
        %v791 = vsel %vm245, %v789, %v787
        %v792 = vsel %vm369, %v791, -inf
        %v793 = vsel %vm370, %v790, -inf
        %v794 = vmax.f32 %v779, %v792
        %v795 = vmax.f32 %v780, %v793
        %796 = vrot.lane.b32.xlu0 %v779, 127
        %v797 = vpop.permute.xlu0 %796
        %798 = vrot.lane.b32.xlu0 %v780, 127
        %v799 = vpop.permute.xlu0 %798
        %v800 = vsel %vm278, %v797, %v799
        %v801 = vsel %vm278, %v799, %v797
        %v802 = vsel %vm394, %v800, -inf
        %v803 = vsel %vm395, %v801, -inf
        %v804 = vmax.f32 %v794, %v802
        %v805 = vmax.f32 %v795, %v803
        %806 = vrot.lane.b32.xlu0 %v804, 16
        %v807 = vpop.permute.xlu0 %806
        %808 = vrot.lane.b32.xlu0 %v805, 16
        %v809 = vpop.permute.xlu0 %808
        %v810 = vsel %vm303, %v807, %v809
        %v811 = vsel %vm303, %v809, %v807
        %v812 = vsel %vm422, %v811, -inf
        %v813 = vsel %vm423, %v810, -inf
        %v814 = vmax.f32 %v804, %v812
        %v815 = vmax.f32 %v805, %v813
        %816 = vrot.lane.b32.xlu0 %v804, 112
        %v817 = vpop.permute.xlu0 %816
        %818 = vrot.lane.b32.xlu0 %v805, 112
        %v819 = vpop.permute.xlu0 %818
        %v820 = vsel %vm328, %v817, %v819
        %v821 = vsel %vm328, %v819, %v817
        %v822 = vsel %vm447, %v820, -inf
        %v823 = vsel %vm448, %v821, -inf
        %v824 = vmax.f32 %v814, %v822
        %v825 = vmax.f32 %v815, %v823
        %s826 = scalar_lea.vmem [#allocation5], 12
        %v827 = vld [vmem:[%s826] sm:$0xf]
        %829 = vset.pattern.permute.xlu0 0
        %830 = vperm.xlu0 %829, %v827
        %v831 = vpop.permute.xlu0 %830
        %v833 = vlaneseq
        %v834 = vshrl.u32 %v833, 7
        %v835 = vsub.s32 0, %v834
        %v836 = vrot.slane %v824, %v835
        %v837 = vlaneseq
        %v838 = vshrl.u32 %v837, 7
        %v839 = vsub.s32 0, %v838
        %v840 = vrot.slane %v825, %v839
        %v841 = vmul.f32 %v831, %v836
        %v842 = vmul.f32 %v831, %v840
        %843 = vset.pattern.permute.xlu0 1
        %844 = vperm.xlu0 %843, %v827
        %v845 = vpop.permute.xlu0 %844
        %v847 = vlaneseq
        %v848 = vshrl.u32 %v847, 7
        %v849 = vsub.s32 1, %v848
        %v850 = vrot.slane %v824, %v849
        %v851 = vlaneseq
        %v852 = vshrl.u32 %v851, 7
        %v853 = vsub.s32 1, %v852
        %v854 = vrot.slane %v825, %v853
        %v855 = vmul.f32 %v845, %v850
        %v856 = vmul.f32 %v845, %v854
        %v857 = vadd.f32 %v841, %v855
        %v858 = vadd.f32 %v842, %v856
        %859 = vset.pattern.permute.xlu0 2
        %860 = vperm.xlu0 %859, %v827
        %v861 = vpop.permute.xlu0 %860
        %v863 = vlaneseq
        %v864 = vshrl.u32 %v863, 7
        %v865 = vsub.s32 2, %v864
        %v866 = vrot.slane %v824, %v865
        %v867 = vlaneseq
        %v868 = vshrl.u32 %v867, 7
        %v869 = vsub.s32 2, %v868
        %v870 = vrot.slane %v825, %v869
        %v871 = vmul.f32 %v861, %v866
        %v872 = vmul.f32 %v861, %v870
        %v873 = vadd.f32 %v857, %v871
        %v874 = vadd.f32 %v858, %v872
        %875 = vset.pattern.permute.xlu0 3
        %876 = vperm.xlu0 %875, %v827
        %v877 = vpop.permute.xlu0 %876
        %v879 = vlaneseq
        %v880 = vshrl.u32 %v879, 7
        %v881 = vsub.s32 3, %v880
        %v882 = vrot.slane %v824, %v881
        %v883 = vlaneseq
        %v884 = vshrl.u32 %v883, 7
        %v885 = vsub.s32 3, %v884
        %v886 = vrot.slane %v825, %v885
        %v887 = vmul.f32 %v877, %v882
        %v888 = vmul.f32 %v877, %v886
        %v889 = vadd.f32 %v873, %v887
        %v890 = vadd.f32 %v874, %v888
        %v893 = vcombine.low %v889, %v890
        %v895 = vadd.f32 %v785, %v893
        %896 = vst [vmem:[%s228] sm:$0xff] %v895
        %s897 = sand.u32 %s119, 1
        %s898 = scalar_lea.sflag [#allocation4], %s897
        %s899 = sand.u32 %s119, 1
        %s900 = smul.addr %s899, 8
        %s901 = scalar_lea.vmem [#allocation7], %s900
        // Predicated region
        $region45: #{tpu_custom_call.1} parent=35 // pred_check
          %p902 = pneg %p129
        $region46: #{tpu_custom_call.1} parent=35 // pred_check_branch
          %904 = sbr.rel (%p902) target = $region48
        $region47: #{tpu_custom_call.1} parent=35 // pred_region
          %s906 = ssub.s32 128, 128
          %907 = vsyncadd %s898, %s906
          %s908 = smul.addr %s22, 2
          %s909 = smul.addr %s908, 64
          %s910 = scalar_lea.hbm %s4, %s909
          %s912 = sshll.u32 %s901, 4
          %s913 = int_to_ptr.vmem [resolvable:$true] %s912
          %915 = dma.vmem_to_hbm [thread:$0]  %s913, 128, %s910, %s898
        $region48: #{tpu_custom_call.1} parent=35 // pred_fallthru
          _
      $region36: #{tpu_custom_call.1} parent=5 // pred_fallthru
        _
      %p916 = scmp.le.s32.totalorder 2, %s17
      // Predicated region
      $region49: #{tpu_custom_call.1} parent=5 // pred_check
        %p917 = pneg %p916
      $region50: #{tpu_custom_call.1} parent=5 // pred_check_branch
        %919 = sbr.rel (%p917) target = $region52
      $region51: #{tpu_custom_call.1} parent=5 // pred_region
        %s920 = ssub.s32 %s17, 2
        // Predicated region
        $region53: #{tpu_custom_call.1} parent=51 // pred_check
          %p921 = pneg %p135
        $region54: #{tpu_custom_call.1} parent=51 // pred_check_branch
          %923 = sbr.rel (%p921) target = $region56
        $region55: #{tpu_custom_call.1} parent=51 // pred_region
          %s924 = sand.u32 %s120, 1
          %s925 = scalar_lea.sflag [#allocation4], %s924
          %s926 = sand.u32 %s120, 1
          %s927 = smul.addr %s926, 8
          %s928 = scalar_lea.vmem [#allocation7], %s927
          %929 = dma.done %s925, 128
        $region56: #{tpu_custom_call.1} parent=51 // pred_fallthru
          _
      $region52: #{tpu_custom_call.1} parent=5 // pred_fallthru
        _
    $region6: #{tpu_custom_call.1} parent=1 // loop_footer
      %s21 = sadd.s32 1, %s17
    $region7: #{tpu_custom_call.1} parent=1 // loop_footer_branch
      %16 = sbr.rel target = $region3
    $region8: #{tpu_custom_call.1} parent=1 // loop_exit
      _
    %930 = vsyncpa [#allocation3], 1
    %s931 = scalar_lea.sflag [#allocation3], 1
    %932 = vsyncpa %s931, 1
    %933 = vsyncpa [#allocation6], 1
    %934 = vsyncpa [#allocation4], 1
    %s935 = scalar_lea.sflag [#allocation4], 1
    %936 = vsyncpa %s935, 1

</llo_original>
